<compile_context>
chip_gen: v5e
topology: v5e:2x2
jax: 0.10.0
libtpu: 0.0.40
codegen_flags: <defaults>
</compile_context>

<pallas_src>
import jax
import jax.numpy as jnp
from jax.experimental import pallas as pl
from jax.experimental.pallas import tpu as pltpu


def _copy_kernel(x_ref, o_ref):
    # Straight tile-to-tile copy; blocks are identically shaped & indexed.
    o_ref[...] = x_ref[...]


def _block_budget_bytes() -> int:
    """Generation-aware per-block VMEM budget (query TPU info, cap at 4 MiB)."""
    try:
        vmem = pltpu.get_tpu_info().vmem_capacity_bytes
    except Exception:  # not on TPU / info unavailable -> conservative default
        vmem = 64 << 20
    # 2 arrays x 2 pipeline buffers per block; keep total well under scoped VMEM.
    return max(1 << 20, min(4 << 20, vmem // 16))


def _choose_tiles(nc: int, l_out: int, itemsize: int, budget: int):
    # Row (sublane) tile: full extent when small (block dim == full array dim
    # is always legal), otherwise 512 rows (multiple of 32 sublanes -> legal
    # packing for f32 / bf16 / int8).
    tr = nc if nc <= 512 else 512
    # Length (lane) tile: must be a multiple of 128 (it can never equal both
    # the input length L and the output length L_out since chomp_size > 0).
    tl_cap = max(128, (budget // max(1, tr * itemsize)) // 128 * 128)
    tl = min(tl_cap, pl.cdiv(l_out, 128) * 128)
    return tr, tl


def chomp1d(x: jax.Array, chomp_size: int) -> jax.Array:
    """Pallas TPU implementation of Chomp1d: y = x[:, :, :-chomp_size]."""
    assert x.ndim == 3, "expected (N, C, L) input"
    n, c, l = x.shape
    assert 0 <= chomp_size < l, "chomp_size must be in [0, L)"
    if chomp_size == 0:  # PyTorch Chomp1d with padding=0: identity
        return x
    l_out = l - chomp_size

    itemsize = jnp.dtype(x.dtype).itemsize
    nc = n * c
    budget = _block_budget_bytes()
    tr, tl = _choose_tiles(nc, l_out, itemsize, budget)

    grid = (pl.cdiv(nc, tr), pl.cdiv(l_out, tl))   # rows outer, L innermost
    block = (tr, tl)
    index_map = lambda i, k: (i, k)                # identical for input and output

    x2d = x.reshape(nc, l)                         # free: contiguous row-major fold
    bytes_accessed = 2 * nc * l_out * itemsize

    y2d = pl.pallas_call(
        _copy_kernel,
        out_shape=jax.ShapeDtypeStruct((nc, l_out), x.dtype),
        grid=grid,
        in_specs=[pl.BlockSpec(block, index_map)],
        out_specs=pl.BlockSpec(block, index_map),
        compiler_params=pltpu.CompilerParams(
            dimension_semantics=("parallel", "parallel"),
            vmem_limit_bytes=32 << 20,  # clears v5e's 16 MiB scoped default
        ),
        cost_estimate=pl.CostEstimate(
            flops=0, transcendentals=0, bytes_accessed=bytes_accessed
        ),
    )(x2d)
    return y2d.reshape(n, c, l_out)


if __name__ == "__main__":
    key = jax.random.PRNGKey(0)

    # Primary small example consistent with Conv1d-style inputs.
    batch, channels, length = 2, 4, 16
    chomp_size = 3  # as a TCN would use: padding = (kernel_size - 1) * dilation
    x = jax.random.normal(key, (batch, channels, length), dtype=jnp.float32)

    y = jax.block_until_ready(chomp1d(x, chomp_size))
    y_ref = x[:, :, :-chomp_size]
    assert y.shape == (batch, channels, length - chomp_size), y.shape
    assert y.dtype == x.dtype
    assert jnp.array_equal(y, y_ref), "mismatch vs reference slice (small case)"

    # Secondary check: multiple row tiles / ragged lane tiles in the grid.
    key2 = jax.random.PRNGKey(1)
    x2 = jax.random.normal(key2, (2, 8, 2200), dtype=jnp.float32)
    y2 = jax.block_until_ready(chomp1d(x2, 100))
    y2_ref = x2[:, :, :-100]
    assert y2.shape == y2_ref.shape
    assert jnp.array_equal(y2, y2_ref), "mismatch vs reference slice (tiled case)"

    # chomp_size == 0 (PyTorch permits it): identity passthrough.
    y3 = jax.block_until_ready(chomp1d(x, 0))
    assert jnp.array_equal(y3, x), "chomp_size=0 should be identity"

    print("KERNEL_OK")
</pallas_src>

<mosaic_0001>
module attributes {stable_mosaic.version = 11 : i64} {
  func.func @_copy_kernel(%arg0: i32, %arg1: i32, %arg2: memref<8x128xf32, #tpu.memory_space<vmem>>, %arg3: memref<8x128xf32, #tpu.memory_space<vmem>>) attributes {dimension_semantics = [#tpu.dimension_semantics<parallel>, #tpu.dimension_semantics<parallel>], iteration_bounds = array<i64: 1, 1>, scalar_prefetch = 0 : i64, scratch_operands = 0 : i64, tpu.core_type = #tpu.core_type<tc>, window_params = [{transform_indices = @transform_0, window_bounds = array<i64: 8, 128>}, {transform_indices = @transform_1, window_bounds = array<i64: 8, 128>}]} {
    %c0 = arith.constant 0 : index
    %c0_0 = arith.constant 0 : index
    %0 = vector.load %arg2[%c0, %c0_0] : memref<8x128xf32, #tpu.memory_space<vmem>>, vector<8x128xf32>
    %c0_1 = arith.constant 0 : index
    %c0_2 = arith.constant 0 : index
    %1 = vector.load %arg3[%c0_1, %c0_2] : memref<8x128xf32, #tpu.memory_space<vmem>>, vector<8x128xf32>
    tpu.vector_store %arg3[%c0_1, %c0_2], %0 {strides = array<i32>} : memref<8x128xf32, #tpu.memory_space<vmem>>, vector<8x128xf32>,
    return
  }
  func.func @transform_0(%arg0: i32, %arg1: i32) -> (i32, i32) {
    %c0_i32 = arith.constant 0 : i32
    return %arg0, %arg1 : i32, i32
  }
  func.func @transform_1(%arg0: i32, %arg1: i32) -> (i32, i32) {
    %c0_i32 = arith.constant 0 : i32
    return %arg0, %arg1 : i32, i32
  }
}

</mosaic_0001>

<llo_original>
// kernel: tpu_custom_call.1
$region0: #{tpu_custom_call.1}
  #allocation0 [shape = 'u32[]', space=smem, size = 0x4, offset = 0x4, fixed_abs, tag = 'smem constant byte address 0x4 - core index']
  #allocation1 [shape = 'u32[72,128]{1,0:T(1,128)}', space=vmem, size = 0x9000, scoped, tag = 'internal scratch']
  %s0 = inlined_call_operand.hbm [shape: f32[8,16], index: 0, kind: input, shape index: {}]
  %s1 = inlined_call_operand.hbm [shape: f32[8,13], index: 1, kind: output, shape index: {}]
  %s2 = sld [smem:[#allocation0]]
  $region18: #{tpu_custom_call.1} parent=0
    _
  %s4 = ssub.s32 1, %s2
  %s5 = scalar_select 0, %s4, %s2
  $region1: #{tpu_custom_call.1} parent=0
    #allocation2 [shape = 'u8[4096]{0}', space=vmem, size = 0x1000, scoped, tag = 'input window, operand 0, single buffered']
    #allocation3 [shape = 's32[1]{0}', space=sflag, size = 0x4, scoped, tag = 'scoped memory for tpu_custom_call.1']
    #allocation4 [shape = 's32[1]{0}', space=sflag, size = 0x4, scoped, tag = 'scoped memory for tpu_custom_call.1']
    #allocation5 [shape = 'u8[4096]{0}', space=vmem, size = 0x1000, scoped, tag = 'output window, operand 0, single buffered']
    %6 = vsyncpa [#allocation3], 0
    %7 = vsyncpa [#allocation4], 0
    // Predicated region
    $region2: #{tpu_custom_call.1} parent=1 // pred_check
      _
    $region3: #{tpu_custom_call.1} parent=1 // pred_check_branch
      %9 = sbr.rel (0) target = $region5
    $region4: #{tpu_custom_call.1} parent=1 // pred_region
      %11 = vsyncadd [#allocation3], 0
      %s13 = sshll.u32 %s0, 4
      %s14 = int_to_ptr.hbm [resolvable:$true] %s13
      %s15 = sshll.u32 [#allocation2], 4
      %s16 = int_to_ptr.vmem [resolvable:$true] %s15
      %18 = dma.hbm_to_vmem [thread:$0]  %s14, 128, %s16, [#allocation3]
    $region5: #{tpu_custom_call.1} parent=1 // pred_fallthru
      _
    // Predicated region
    $region6: #{tpu_custom_call.1} parent=1 // pred_check
      _
    $region7: #{tpu_custom_call.1} parent=1 // pred_check_branch
      %20 = sbr.rel (0) target = $region9
    $region8: #{tpu_custom_call.1} parent=1 // pred_region
      %22 = dma.done [#allocation3], 128
    $region9: #{tpu_custom_call.1} parent=1 // pred_fallthru
      _
    %v23 = vld [vmem:[#allocation2] sm:$0xff]
    %24 = vst [vmem:[#allocation5] sm:$0xff] %v23
    // Predicated region
    $region10: #{tpu_custom_call.1} parent=1 // pred_check
      _
    $region11: #{tpu_custom_call.1} parent=1 // pred_check_branch
      %26 = sbr.rel (0) target = $region13
    $region12: #{tpu_custom_call.1} parent=1 // pred_region
      %28 = vsyncadd [#allocation4], 0
      %s30 = sshll.u32 [#allocation5], 4
      %s31 = int_to_ptr.vmem [resolvable:$true] %s30
      %s32 = sshll.u32 %s1, 4
      %s33 = int_to_ptr.hbm [resolvable:$true] %s32
      %35 = dma.vmem_to_hbm [thread:$0]  %s31, 128, %s33, [#allocation4]
    $region13: #{tpu_custom_call.1} parent=1 // pred_fallthru
      _
    // Predicated region
    $region14: #{tpu_custom_call.1} parent=1 // pred_check
      _
    $region15: #{tpu_custom_call.1} parent=1 // pred_check_branch
      %37 = sbr.rel (0) target = $region17
    $region16: #{tpu_custom_call.1} parent=1 // pred_region
      %39 = dma.done [#allocation4], 128
    $region17: #{tpu_custom_call.1} parent=1 // pred_fallthru
      _
    %40 = vsyncpa [#allocation3], 1
    %41 = vsyncpa [#allocation4], 1

</llo_original>
